<compile_context>
chip_gen: v5e
topology: v5e:2x2
jax: 0.10.0
libtpu: 0.0.40
codegen_flags: <defaults>
</compile_context>

<pallas_src>
import functools
import math

import jax
import jax.numpy as jnp
import numpy as np
from jax import lax
from jax.experimental import pallas as pl
from jax.experimental.pallas import tpu as pltpu

# ---- synthetic CBML config -------------------------------------------------
POS_A = 2.0
POS_B = 2.0
NEG_A = 0.4
NEG_B = 2.0
MARGIN = 0.1
WEIGHT = 1.0
HYPER_WEIGHT = 0.5
EPSILON = 1e-5
_BIG = 1e9          # finite sentinel for masked min/max
_BIG_HALF = 5e8

# Shared-exponent constants (valid because POS_B == NEG_B):
#   exp(-(s - POS_A)/POS_B) = _CP * exp(-s/POS_B)
#   exp( (s - NEG_A)/NEG_B) = _CN * exp( s/NEG_B)
assert POS_B == NEG_B, "exp-sharing trick assumes POS_B == NEG_B"
_INV_B = 1.0 / POS_B
_CP = math.exp(POS_A / POS_B)
_CN = math.exp(-NEG_A / NEG_B)

# TODO(synk): adaptive_neg=False branch (torch.argsort + top-100 negatives) needs a
# sort and has no clean Pallas equivalent; only adaptive_neg=True is implemented.
# TODO(synk): only TYPE='log' is implemented ('sqrt' / linear types omitted).


def _cbml_kernel(feats_ref, lab_row_ref, lab_col_ref, out_ref, sim_ref, *,
                 b_real, tile_m, tile_n):
    b_pad, _ = feats_ref.shape
    num_chunks = b_pad // tile_n
    unroll = num_chunks if num_chunks <= 8 else 1
    i = pl.program_id(0)

    row_start = pl.multiple_of(i * tile_m, tile_m)
    lab_col = lab_col_ref[...]                                # (tile_m, 1) i32
    row_ids = lax.broadcasted_iota(jnp.int32, (tile_m, 1), 0) + i * tile_m

    # ---- pass 1: chunked MXU sim -> scratch + row min/max/sum --------------
    def pass1(c, carry):
        row_sum, max_neg, min_pos = carry
        col0 = pl.multiple_of(c * tile_n, tile_n)
        sim = lax.dot_general(
            feats_ref[pl.ds(row_start, tile_m), :],
            feats_ref[pl.ds(col0, tile_n), :],
            dimension_numbers=(((1,), (1,)), ((), ())),
            preferred_element_type=jnp.float32)               # (tile_m, tile_n)
        sim_ref[c] = sim

        lab_r = lab_row_ref[c]                                # (1, tile_n) i32
        same = lab_col == lab_r
        col_ids = (lax.broadcasted_iota(jnp.int32, (tile_m, tile_n), 1)
                   + c * tile_n)
        neg = jnp.logical_not(same)
        # Explicit self-pair exclusion: redundant with the (1 - eps) filter
        # under exact arithmetic, but robust to bf16 rounding of diag(sim).
        pos = jnp.logical_and(jnp.logical_and(same, col_ids != row_ids),
                              sim < (1.0 - EPSILON))
        if b_pad != b_real:
            col_valid = col_ids < b_real
            neg = jnp.logical_and(neg, col_valid)
            pos = jnp.logical_and(pos, col_valid)

        row_sum = row_sum + jnp.sum(sim, axis=-1, keepdims=True)
        max_neg = jnp.maximum(
            max_neg,
            jnp.max(jnp.where(neg, sim, -_BIG), axis=-1, keepdims=True))
        min_pos = jnp.minimum(
            min_pos,
            jnp.min(jnp.where(pos, sim, _BIG), axis=-1, keepdims=True))
        return row_sum, max_neg, min_pos

    zeros = jnp.zeros((tile_m, 1), jnp.float32)
    row_sum, max_neg, min_pos = lax.fori_loop(
        0, num_chunks, pass1,
        (zeros,
         jnp.full((tile_m, 1), -_BIG, jnp.float32),
         jnp.full((tile_m, 1), _BIG, jnp.float32)),
        unroll=unroll)

    # ---- per-row mean / margin thresholds -----------------------------------
    # Padded (zero) rows/cols contribute exactly 0 to row_sum, so dividing by
    # the real batch size reproduces torch.mean(sim_mat[i]).
    row_mean = row_sum * (1.0 / b_real)
    mean_ = ((1.0 - HYPER_WEIGHT) * row_mean
             + (0.5 * HYPER_WEIGHT) * (min_pos + max_neg))
    # pos kept iff sim < min(1 - eps, max_neg + MARGIN);
    # neg kept iff sim > min_pos - MARGIN.
    thr_pos = jnp.minimum(max_neg + MARGIN, 1.0 - EPSILON)
    thr_neg = min_pos - MARGIN

    # ---- pass 2: fp / fn / sigma over the cached sim strip ------------------
    def pass2(c, carry):
        fp, fn, sig = carry
        sim = sim_ref[c]                                      # (tile_m, tile_n)
        lab_r = lab_row_ref[c]
        same = lab_col == lab_r
        col_ids = (lax.broadcasted_iota(jnp.int32, (tile_m, tile_n), 1)
                   + c * tile_n)
        neg = jnp.logical_not(same)
        pos = jnp.logical_and(same, col_ids != row_ids)
        if b_pad != b_real:
            col_valid = col_ids < b_real
            neg = jnp.logical_and(neg, col_valid)
            pos = jnp.logical_and(pos, col_valid)

        # One EUP exp shared by both branches; the inverse uses the approx
        # reciprocal (EUP slot -> nearly free).
        e = jnp.exp(_INV_B * sim)
        exp_n = _CN * e
        exp_p = _CP * pl.reciprocal(e, approx=True)

        fp = fp + jnp.sum(
            jnp.where(jnp.logical_and(pos, sim < thr_pos), exp_p, 0.0),
            axis=-1, keepdims=True)
        fn = fn + jnp.sum(
            jnp.where(jnp.logical_and(neg, sim > thr_neg), exp_n, 0.0),
            axis=-1, keepdims=True)
        # Direct sum((s - mean_)^2): no cancellation-prone moment expansion.
        d = jnp.where(neg, sim - mean_, 0.0)
        sig = sig + jnp.sum(d * d, axis=-1, keepdims=True)
        return fp, fn, sig

    fp, fn, sig = lax.fori_loop(0, num_chunks, pass2, (zeros, zeros, zeros),
                                unroll=unroll)

    loss_i = jnp.log(1.0 + fp) + jnp.log(1.0 + fn) + WEIGHT * sig

    # Row validity without extra count reductions:
    #   >=1 pos after the (1-eps) filter      <=> min_pos is not the +sentinel
    #   >=1 neg                               <=> max_neg is not the -sentinel
    #   both margin-filtered sets non-empty   <=> min_pos - max_neg < MARGIN
    valid = jnp.logical_and(
        jnp.logical_and(min_pos < _BIG_HALF, max_neg > -_BIG_HALF),
        (min_pos - max_neg) < MARGIN)
    out_ref[...] = jnp.where(valid, loss_i, 0.0)


def _pick_tile_m(b):
    if b < 128:
        # bf16 packs 16 rows / vreg -> round tiny batches up to a 16-row strip.
        return max(16, ((b + 15) // 16) * 16)
    kind = ""
    try:
        kind = jax.devices()[0].device_kind.lower()
    except Exception:
        pass
    # v6e: 256-row strips feed the 256x256 MXU natively and halve grid-step
    # overhead (128 MiB VMEM absorbs the larger scratch).  v5e (128x128 MXU)
    # and v7x (64 MiB VMEM, keep >=2 tiles for megacore sharding) stay at 128.
    if b >= 512 and "v6" in kind:
        return 256
    return 128


def _pick_tile_n(b_pad):
    if b_pad <= 512:
        return b_pad
    for t in (512, 256, 128):
        if b_pad % t == 0:
            return t
    return 128  # unreachable: b_pad is always a multiple of 128 here


def _cbml_per_row(feats_bf, lab_row, lab_col, *, b_real, tile_m, tile_n,
                  single_buffer_resident):
    b_pad, d_pad = feats_bf.shape
    num_tiles = b_pad // tile_m
    num_chunks = b_pad // tile_n

    resident_kw = ({"pipeline_mode": pl.Buffered(1)}
                   if single_buffer_resident else {})

    feats_bytes = b_pad * d_pad * 2
    sim_bytes = num_chunks * tile_m * tile_n * 4
    vmem_need = (1 if single_buffer_resident else 2) * feats_bytes + sim_bytes
    vmem_limit = min(max(48 << 20, int(vmem_need * 1.25) + (2 << 20)), 64 << 20)

    return pl.pallas_call(
        functools.partial(_cbml_kernel, b_real=b_real, tile_m=tile_m,
                          tile_n=tile_n),
        out_shape=jax.ShapeDtypeStruct((b_pad, 1), jnp.float32),
        grid_spec=pltpu.PrefetchScalarGridSpec(
            num_scalar_prefetch=0,
            grid=(num_tiles,),
            in_specs=[
                # Full feats resident in VMEM: the single source for both the
                # row strip and the column chunks (feats read from HBM once).
                pl.BlockSpec((b_pad, d_pad), lambda i: (0, 0), **resident_kw),
                # Labels in chunked row layout (grid-invariant).
                pl.BlockSpec((num_chunks, 1, tile_n), lambda i: (0, 0, 0),
                             **resident_kw),
                # Per-tile labels, column layout (pipelined).
                pl.BlockSpec((tile_m, 1), lambda i: (i, 0)),
            ],
            out_specs=pl.BlockSpec((tile_m, 1), lambda i: (i, 0)),
            scratch_shapes=[
                pltpu.VMEM((num_chunks, tile_m, tile_n), jnp.float32)],
        ),
        compiler_params=pltpu.CompilerParams(
            dimension_semantics=("parallel",),
            vmem_limit_bytes=vmem_limit,
        ),
    )(feats_bf, lab_row, lab_col)


@functools.partial(jax.jit, static_argnames=("single_buffer_resident",))
def cbml_loss(feats, labels, single_buffer_resident=True):
    """feats: (B, D) float, labels: (B,) int -> scalar f32 loss."""
    b, d = feats.shape
    tile_m = _pick_tile_m(b)
    b_pad = ((b + tile_m - 1) // tile_m) * tile_m
    d_pad = ((d + 127) // 128) * 128        # lane-aligned D (zero cols are a no-op)
    tile_n = _pick_tile_n(b_pad)
    num_chunks = b_pad // tile_n

    feats_bf = feats.astype(jnp.bfloat16)   # bf16 MXU operands, f32 accumulation
    if b_pad != b or d_pad != d:
        feats_bf = jnp.pad(feats_bf, ((0, b_pad - b), (0, d_pad - d)))
    labels = labels.astype(jnp.int32)
    if b_pad != b:
        labels = jnp.pad(labels, (0, b_pad - b),
                         constant_values=jnp.iinfo(jnp.int32).min)
    lab_row = labels.reshape(num_chunks, 1, tile_n)
    lab_col = labels.reshape(b_pad, 1)

    per_row = _cbml_per_row(feats_bf, lab_row, lab_col, b_real=b,
                            tile_m=tile_m, tile_n=tile_n,
                            single_buffer_resident=single_buffer_resident)

    # Final reduction and 1/batch_size in XLA (trivially fused).
    return jnp.sum(per_row[:b, 0]) / b


def cbml_loss_ref(feats, labels):
    """NumPy loop mirroring the PyTorch forward (type='log', adaptive_neg).

    The only addition is dropping the explicit self-pair before the (1 - eps)
    filter, which is a no-op under exact arithmetic (self-sim == 1) and mirrors
    the kernel's bf16-robust handling.
    """
    feats = np.asarray(feats, dtype=np.float32)
    labels = np.asarray(labels)
    b = feats.shape[0]
    sim = feats @ feats.T
    losses = []
    for i in range(b):
        pos_sel = labels == labels[i]
        pos_sel[i] = False                       # self-pair
        pos_pair_ = sim[i][pos_sel]
        pos_pair_ = pos_pair_[pos_pair_ < 1 - EPSILON]
        neg_pair_ = sim[i][labels != labels[i]]
        if len(neg_pair_) < 1 or len(pos_pair_) < 1:
            continue
        mean_ = (1.0 - HYPER_WEIGHT) * np.mean(sim[i]) + HYPER_WEIGHT * (
            np.min(pos_pair_) + np.max(neg_pair_)) / 2.0
        sigma_ = np.sum((neg_pair_ - mean_) ** 2)
        pos_pair = pos_pair_[pos_pair_ - MARGIN < np.max(neg_pair_)]
        neg_pair = neg_pair_[neg_pair_ + MARGIN > np.min(pos_pair_)]
        if len(neg_pair) < 1 or len(pos_pair) < 1:
            continue
        fp = 1.0 + np.sum(np.exp(-1.0 / POS_B * (pos_pair - POS_A)))
        fn = 1.0 + np.sum(np.exp(1.0 / NEG_B * (neg_pair - NEG_A)))
        losses.append(np.log(fp) + np.log(fn) + WEIGHT * sigma_)
    if len(losses) == 0:
        return np.float32(0.0)
    return np.float32(sum(losses) / b)


if __name__ == "__main__":
    key = jax.random.PRNGKey(0)
    B, D = 8, 32
    feats = jax.random.normal(key, (B, D), dtype=jnp.float32)
    # L2-normalize (standard for this metric-learning loss).
    feats = feats / jnp.linalg.norm(feats, axis=-1, keepdims=True)
    labels = jnp.array([0, 0, 1, 1, 2, 2, 3, 3], dtype=jnp.int32)

    try:
        loss = jax.block_until_ready(cbml_loss(feats, labels))
    except Exception:
        # If this JAX build rejects pl.Buffered(1) on grid-invariant inputs,
        # fall back to default double-buffering of the resident feats block.
        loss = jax.block_until_ready(
            cbml_loss(feats, labels, single_buffer_resident=False))

    # Reference uses the same bf16-rounded feats so the comparison is tight
    # (the kernel feeds the MXU bf16 operands with f32 accumulation).  The
    # approx-reciprocal in the shared-exp trick bounds the fp-term error to
    # ~1e-4 relative, comfortably inside the tolerance below.
    feats_bf_np = np.asarray(feats.astype(jnp.bfloat16).astype(jnp.float32))
    ref = cbml_loss_ref(feats_bf_np, np.asarray(labels))
    np.testing.assert_allclose(np.asarray(loss), ref, rtol=2e-3, atol=2e-3)

    print("KERNEL_OK")
</pallas_src>

<mosaic_0001>
module attributes {stable_mosaic.version = 11 : i64} {
  func.func @_cbml_kernel(%arg0: i32, %arg1: memref<16x128xbf16, #tpu.memory_space<vmem>>, %arg2: memref<1x1x16xi32, #tpu.memory_space<vmem>>, %arg3: memref<16x1xi32, #tpu.memory_space<vmem>>, %arg4: memref<16x1xf32, #tpu.memory_space<vmem>>, %arg5: memref<1x16x16xf32, #tpu.memory_space<vmem>>) attributes {dimension_semantics = [#tpu.dimension_semantics<parallel>], iteration_bounds = array<i64: 1>, scalar_prefetch = 0 : i64, scratch_operands = 1 : i64, tpu.core_type = #tpu.core_type<tc>, window_params = [{pipeline_mode = #tpu.pipeline_mode<synchronous>, transform_indices = @transform_0, window_bounds = array<i64: 16, 128>}, {pipeline_mode = #tpu.pipeline_mode<synchronous>, transform_indices = @transform_1, window_bounds = array<i64: 1, 1, 16>}, {transform_indices = @transform_2, window_bounds = array<i64: 16, 1>}, {transform_indices = @transform_3, window_bounds = array<i64: 16, 1>}]} {
    %c16_i32 = arith.constant 16 : i32
    %0 = arith.muli %arg0, %c16_i32 : i32
    %1 = tpu.assume_multiple %0, 16 : i32
    %c0 = arith.constant 0 : index
    %c0_0 = arith.constant 0 : index
    %2 = vector.load %arg3[%c0, %c0_0] : memref<16x1xi32, #tpu.memory_space<vmem>>, vector<16x1xi32>
    %3 = tpu.iota {dimensions = array<i32: 0>} : vector<16x1xi32>
    %c16_i32_1 = arith.constant 16 : i32
    %4 = arith.muli %arg0, %c16_i32_1 : i32
    %5 = vector.broadcast %4 : i32 to vector<16x1xi32>
    %6 = arith.addi %3, %5 : vector<16x1xi32>
    %cst = arith.constant 0.000000e+00 : f32
    %7 = vector.broadcast %cst : f32 to vector<16x1xf32>
    %cst_2 = arith.constant -1.000000e+09 : f32
    %8 = vector.broadcast %cst_2 : f32 to vector<16x1xf32>
    %cst_3 = arith.constant 1.000000e+09 : f32
    %9 = vector.broadcast %cst_3 : f32 to vector<16x1xf32>
    %c0_i32 = arith.constant 0 : i32
    %c16_i32_4 = arith.constant 16 : i32
    %10 = arith.muli %c0_i32, %c16_i32_4 : i32
    %11 = tpu.assume_multiple %10, 16 : i32
    %12 = arith.index_cast %1 : i32 to index
    %c0_5 = arith.constant 0 : index
    %13 = vector.load %arg1[%12, %c0_5] : memref<16x128xbf16, #tpu.memory_space<vmem>>, vector<16x128xbf16>
    %14 = arith.index_cast %11 : i32 to index
    %c0_6 = arith.constant 0 : index
    %15 = vector.load %arg1[%14, %c0_6] : memref<16x128xbf16, #tpu.memory_space<vmem>>, vector<16x128xbf16>
    %cst_7 = arith.constant dense<0.000000e+00> : vector<16x16xf32>
    %16 = tpu.matmul %13, %15, %cst_7 {dimension_numbers = #tpu.dot_dimension_numbers<[1], [1], [0], [0], [0, 0, 1, 0], [], []>} : vector<16x128xbf16>, vector<16x128xbf16>, vector<16x16xf32> -> vector<16x16xf32>
    %17 = arith.index_cast %c0_i32 : i32 to index
    %c0_8 = arith.constant 0 : index
    %c0_9 = arith.constant 0 : index
    %18 = vector.load %arg5[%17, %c0_8, %c0_9] : memref<1x16x16xf32, #tpu.memory_space<vmem>>, vector<1x16x16xf32>
    %19 = vector.shape_cast %18 : vector<1x16x16xf32> to vector<16x16xf32>
    %20 = vector.shape_cast %16 : vector<16x16xf32> to vector<1x16x16xf32>
    tpu.vector_store %arg5[%17, %c0_8, %c0_9], %20 {strides = array<i32>} : memref<1x16x16xf32, #tpu.memory_space<vmem>>, vector<1x16x16xf32>,
    %21 = arith.index_cast %c0_i32 : i32 to index
    %c0_10 = arith.constant 0 : index
    %c0_11 = arith.constant 0 : index
    %22 = vector.load %arg2[%21, %c0_10, %c0_11] : memref<1x1x16xi32, #tpu.memory_space<vmem>>, vector<1x1x16xi32>
    %23 = vector.shape_cast %22 : vector<1x1x16xi32> to vector<1x16xi32>
    %24 = vector.broadcast %2 : vector<16x1xi32> to vector<16x16xi32>
    %25 = vector.broadcast %23 : vector<1x16xi32> to vector<16x16xi32>
    %26 = arith.cmpi eq, %24, %25 : vector<16x16xi32>
    %27 = tpu.iota {dimensions = array<i32: 1>} : vector<16x16xi32>
    %c16_i32_12 = arith.constant 16 : i32
    %28 = arith.muli %c0_i32, %c16_i32_12 : i32
    %29 = vector.broadcast %28 : i32 to vector<16x16xi32>
    %30 = arith.addi %27, %29 : vector<16x16xi32>
    %cst_13 = arith.constant dense<true> : vector<16x16xi1>
    %31 = arith.xori %26, %cst_13 : vector<16x16xi1>
    %32 = vector.broadcast %6 : vector<16x1xi32> to vector<16x16xi32>
    %33 = arith.cmpi ne, %30, %32 : vector<16x16xi32>
    %34 = arith.andi %26, %33 : vector<16x16xi1>
    %cst_14 = arith.constant 0.999989986 : f32
    %35 = vector.broadcast %cst_14 : f32 to vector<16x16xf32>
    %36 = arith.cmpf olt, %16, %35 : vector<16x16xf32>
    %37 = arith.andi %34, %36 : vector<16x16xi1>
    %c8_i32 = arith.constant 8 : i32
    %38 = vector.broadcast %c8_i32 : i32 to vector<16x16xi32>
    %39 = arith.cmpi slt, %30, %38 : vector<16x16xi32>
    %40 = arith.andi %31, %39 : vector<16x16xi1>
    %41 = arith.andi %37, %39 : vector<16x16xi1>
    %cst_15 = arith.constant dense<0.000000e+00> : vector<16xf32>
    %42 = vector.multi_reduction <add>, %16, %cst_15 [1] : vector<16x16xf32> to vector<16xf32>
    %43 = vector.shape_cast %42 : vector<16xf32> to vector<16x1xf32>
    %44 = arith.addf %7, %43 : vector<16x1xf32>
    %cst_16 = arith.constant -1.000000e+09 : f32
    %45 = vector.broadcast %cst_16 : f32 to vector<16x16xf32>
    %46 = arith.select %40, %16, %45 : vector<16x16xi1>, vector<16x16xf32>
    %cst_17 = arith.constant dense<0xFF800000> : vector<16xf32>
    %47 = vector.multi_reduction <maximumf>, %46, %cst_17 [1] : vector<16x16xf32> to vector<16xf32>
    %48 = vector.shape_cast %47 : vector<16xf32> to vector<16x1xf32>
    %49 = arith.maximumf %8, %48 : vector<16x1xf32>
    %cst_18 = arith.constant 1.000000e+09 : f32
    %50 = vector.broadcast %cst_18 : f32 to vector<16x16xf32>
    %51 = arith.select %41, %16, %50 : vector<16x16xi1>, vector<16x16xf32>
    %cst_19 = arith.constant dense<0x7F800000> : vector<16xf32>
    %52 = vector.multi_reduction <minimumf>, %51, %cst_19 [1] : vector<16x16xf32> to vector<16xf32>
    %53 = vector.shape_cast %52 : vector<16xf32> to vector<16x1xf32>
    %54 = arith.minimumf %9, %53 : vector<16x1xf32>
    %c1_i32 = arith.constant 1 : i32
    %cst_20 = arith.constant 1.250000e-01 : f32
    %55 = vector.broadcast %cst_20 : f32 to vector<16x1xf32>
    %56 = arith.mulf %44, %55 : vector<16x1xf32>
    %cst_21 = arith.constant 5.000000e-01 : f32
    %57 = vector.broadcast %cst_21 : f32 to vector<16x1xf32>
    %58 = arith.mulf %57, %56 : vector<16x1xf32>
    %59 = arith.addf %54, %49 : vector<16x1xf32>
    %cst_22 = arith.constant 2.500000e-01 : f32
    %60 = vector.broadcast %cst_22 : f32 to vector<16x1xf32>
    %61 = arith.mulf %60, %59 : vector<16x1xf32>
    %62 = arith.addf %58, %61 : vector<16x1xf32>
    %cst_23 = arith.constant 1.000000e-01 : f32
    %63 = vector.broadcast %cst_23 : f32 to vector<16x1xf32>
    %64 = arith.addf %49, %63 : vector<16x1xf32>
    %cst_24 = arith.constant 0.999989986 : f32
    %65 = vector.broadcast %cst_24 : f32 to vector<16x1xf32>
    %66 = arith.minimumf %64, %65 : vector<16x1xf32>
    %cst_25 = arith.constant 1.000000e-01 : f32
    %67 = vector.broadcast %cst_25 : f32 to vector<16x1xf32>
    %68 = arith.subf %54, %67 : vector<16x1xf32>
    %c0_i32_26 = arith.constant 0 : i32
    %69 = arith.index_cast %c0_i32_26 : i32 to index
    %c0_27 = arith.constant 0 : index
    %c0_28 = arith.constant 0 : index
    %70 = vector.load %arg5[%69, %c0_27, %c0_28] : memref<1x16x16xf32, #tpu.memory_space<vmem>>, vector<1x16x16xf32>
    %71 = vector.shape_cast %70 : vector<1x16x16xf32> to vector<16x16xf32>
    %72 = arith.index_cast %c0_i32_26 : i32 to index
    %c0_29 = arith.constant 0 : index
    %c0_30 = arith.constant 0 : index
    %73 = vector.load %arg2[%72, %c0_29, %c0_30] : memref<1x1x16xi32, #tpu.memory_space<vmem>>, vector<1x1x16xi32>
    %74 = vector.shape_cast %73 : vector<1x1x16xi32> to vector<1x16xi32>
    %75 = vector.broadcast %2 : vector<16x1xi32> to vector<16x16xi32>
    %76 = vector.broadcast %74 : vector<1x16xi32> to vector<16x16xi32>
    %77 = arith.cmpi eq, %75, %76 : vector<16x16xi32>
    %78 = tpu.iota {dimensions = array<i32: 1>} : vector<16x16xi32>
    %c16_i32_31 = arith.constant 16 : i32
    %79 = arith.muli %c0_i32_26, %c16_i32_31 : i32
    %80 = vector.broadcast %79 : i32 to vector<16x16xi32>
    %81 = arith.addi %78, %80 : vector<16x16xi32>
    %cst_32 = arith.constant dense<true> : vector<16x16xi1>
    %82 = arith.xori %77, %cst_32 : vector<16x16xi1>
    %83 = vector.broadcast %6 : vector<16x1xi32> to vector<16x16xi32>
    %84 = arith.cmpi ne, %81, %83 : vector<16x16xi32>
    %85 = arith.andi %77, %84 : vector<16x16xi1>
    %c8_i32_33 = arith.constant 8 : i32
    %86 = vector.broadcast %c8_i32_33 : i32 to vector<16x16xi32>
    %87 = arith.cmpi slt, %81, %86 : vector<16x16xi32>
    %88 = arith.andi %82, %87 : vector<16x16xi1>
    %89 = arith.andi %85, %87 : vector<16x16xi1>
    %cst_34 = arith.constant 5.000000e-01 : f32
    %90 = vector.broadcast %cst_34 : f32 to vector<16x16xf32>
    %91 = arith.mulf %90, %71 : vector<16x16xf32>
    %92 = math.exp %91 : vector<16x16xf32>
    %cst_35 = arith.constant 0.818730771 : f32
    %93 = vector.broadcast %cst_35 : f32 to vector<16x16xf32>
    %94 = arith.mulf %93, %92 : vector<16x16xf32>
    %95 = tpu.reciprocal %92 {approx = true} : vector<16x16xf32> -> vector<16x16xf32>
    %cst_36 = arith.constant 2.71828175 : f32
    %96 = vector.broadcast %cst_36 : f32 to vector<16x16xf32>
    %97 = arith.mulf %96, %95 : vector<16x16xf32>
    %98 = vector.broadcast %66 : vector<16x1xf32> to vector<16x16xf32>
    %99 = arith.cmpf olt, %71, %98 : vector<16x16xf32>
    %100 = arith.andi %89, %99 : vector<16x16xi1>
    %cst_37 = arith.constant 0.000000e+00 : f32
    %101 = vector.broadcast %cst_37 : f32 to vector<16x16xf32>
    %102 = arith.select %100, %97, %101 : vector<16x16xi1>, vector<16x16xf32>
    %cst_38 = arith.constant dense<0.000000e+00> : vector<16xf32>
    %103 = vector.multi_reduction <add>, %102, %cst_38 [1] : vector<16x16xf32> to vector<16xf32>
    %104 = vector.shape_cast %103 : vector<16xf32> to vector<16x1xf32>
    %105 = arith.addf %7, %104 : vector<16x1xf32>
    %106 = vector.broadcast %68 : vector<16x1xf32> to vector<16x16xf32>
    %107 = arith.cmpf ogt, %71, %106 : vector<16x16xf32>
    %108 = arith.andi %88, %107 : vector<16x16xi1>
    %cst_39 = arith.constant 0.000000e+00 : f32
    %109 = vector.broadcast %cst_39 : f32 to vector<16x16xf32>
    %110 = arith.select %108, %94, %109 : vector<16x16xi1>, vector<16x16xf32>
    %cst_40 = arith.constant dense<0.000000e+00> : vector<16xf32>
    %111 = vector.multi_reduction <add>, %110, %cst_40 [1] : vector<16x16xf32> to vector<16xf32>
    %112 = vector.shape_cast %111 : vector<16xf32> to vector<16x1xf32>
    %113 = arith.addf %7, %112 : vector<16x1xf32>
    %114 = vector.broadcast %62 : vector<16x1xf32> to vector<16x16xf32>
    %115 = arith.subf %71, %114 : vector<16x16xf32>
    %cst_41 = arith.constant 0.000000e+00 : f32
    %116 = vector.broadcast %cst_41 : f32 to vector<16x16xf32>
    %117 = arith.select %88, %115, %116 : vector<16x16xi1>, vector<16x16xf32>
    %118 = arith.mulf %117, %117 : vector<16x16xf32>
    %cst_42 = arith.constant dense<0.000000e+00> : vector<16xf32>
    %119 = vector.multi_reduction <add>, %118, %cst_42 [1] : vector<16x16xf32> to vector<16xf32>
    %120 = vector.shape_cast %119 : vector<16xf32> to vector<16x1xf32>
    %121 = arith.addf %7, %120 : vector<16x1xf32>
    %c1_i32_43 = arith.constant 1 : i32
    %cst_44 = arith.constant 1.000000e+00 : f32
    %122 = vector.broadcast %cst_44 : f32 to vector<16x1xf32>
    %123 = arith.addf %122, %105 : vector<16x1xf32>
    %124 = math.log %123 : vector<16x1xf32>
    %cst_45 = arith.constant 1.000000e+00 : f32
    %125 = vector.broadcast %cst_45 : f32 to vector<16x1xf32>
    %126 = arith.addf %125, %113 : vector<16x1xf32>
    %127 = math.log %126 : vector<16x1xf32>
    %128 = arith.addf %124, %127 : vector<16x1xf32>
    %cst_46 = arith.constant 1.000000e+00 : f32
    %129 = vector.broadcast %cst_46 : f32 to vector<16x1xf32>
    %130 = arith.mulf %129, %121 : vector<16x1xf32>
    %131 = arith.addf %128, %130 : vector<16x1xf32>
    %cst_47 = arith.constant 5.000000e+08 : f32
    %132 = vector.broadcast %cst_47 : f32 to vector<16x1xf32>
    %133 = arith.cmpf olt, %54, %132 : vector<16x1xf32>
    %cst_48 = arith.constant -5.000000e+08 : f32
    %134 = vector.broadcast %cst_48 : f32 to vector<16x1xf32>
    %135 = arith.cmpf ogt, %49, %134 : vector<16x1xf32>
    %136 = arith.andi %133, %135 : vector<16x1xi1>
    %137 = arith.subf %54, %49 : vector<16x1xf32>
    %cst_49 = arith.constant 1.000000e-01 : f32
    %138 = vector.broadcast %cst_49 : f32 to vector<16x1xf32>
    %139 = arith.cmpf olt, %137, %138 : vector<16x1xf32>
    %140 = arith.andi %136, %139 : vector<16x1xi1>
    %cst_50 = arith.constant 0.000000e+00 : f32
    %141 = vector.broadcast %cst_50 : f32 to vector<16x1xf32>
    %142 = arith.select %140, %131, %141 : vector<16x1xi1>, vector<16x1xf32>
    %c0_51 = arith.constant 0 : index
    %c0_52 = arith.constant 0 : index
    %143 = vector.load %arg4[%c0_51, %c0_52] : memref<16x1xf32, #tpu.memory_space<vmem>>, vector<16x1xf32>
    tpu.vector_store %arg4[%c0_51, %c0_52], %142 {strides = array<i32>} : memref<16x1xf32, #tpu.memory_space<vmem>>, vector<16x1xf32>,
    return
  }
  func.func @transform_0(%arg0: i32) -> (i32, i32) {
    %c0_i32 = arith.constant 0 : i32
    %c0_i32_0 = arith.constant 0 : i32
    %c0_i32_1 = arith.constant 0 : i32
    return %c0_i32, %c0_i32_0 : i32, i32
  }
  func.func @transform_1(%arg0: i32) -> (i32, i32, i32) {
    %c0_i32 = arith.constant 0 : i32
    %c0_i32_0 = arith.constant 0 : i32
    %c0_i32_1 = arith.constant 0 : i32
    %c0_i32_2 = arith.constant 0 : i32
    return %c0_i32, %c0_i32_0, %c0_i32_1 : i32, i32, i32
  }
  func.func @transform_2(%arg0: i32) -> (i32, i32) {
    %c0_i32 = arith.constant 0 : i32
    %c0_i32_0 = arith.constant 0 : i32
    return %arg0, %c0_i32 : i32, i32
  }
  func.func @transform_3(%arg0: i32) -> (i32, i32) {
    %c0_i32 = arith.constant 0 : i32
    %c0_i32_0 = arith.constant 0 : i32
    return %arg0, %c0_i32 : i32, i32
  }
}

module attributes {stable_mosaic.version = 11 : i64} {
  func.func @_cbml_kernel(%arg0: i32, %arg1: memref<16x128xbf16, #tpu.memory_space<vmem>>, %arg2: memref<1x1x16xi32, #tpu.memory_space<vmem>>, %arg3: memref<16x1xi32, #tpu.memory_space<vmem>>, %arg4: memref<16x1xf32, #tpu.memory_space<vmem>>, %arg5: memref<1x16x16xf32, #tpu.memory_space<vmem>>) attributes {dimension_semantics = [#tpu.dimension_semantics<parallel>], iteration_bounds = array<i64: 1>, scalar_prefetch = 0 : i64, scratch_operands = 1 : i64, tpu.core_type = #tpu.core_type<tc>, window_params = [{pipeline_mode = #tpu.pipeline_mode<synchronous>, transform_indices = @transform_0, window_bounds = array<i64: 16, 128>}, {pipeline_mode = #tpu.pipeline_mode<synchronous>, transform_indices = @transform_1, window_bounds = array<i64: 1, 1, 16>}, {transform_indices = @transform_2, window_bounds = array<i64: 16, 1>}, {transform_indices = @transform_3, window_bounds = array<i64: 16, 1>}]} {
    %c16_i32 = arith.constant 16 : i32
    %0 = arith.muli %arg0, %c16_i32 : i32
    %1 = tpu.assume_multiple %0, 16 : i32
    %c0 = arith.constant 0 : index
    %c0_0 = arith.constant 0 : index
    %2 = vector.load %arg3[%c0, %c0_0] : memref<16x1xi32, #tpu.memory_space<vmem>>, vector<16x1xi32>
    %3 = tpu.iota {dimensions = array<i32: 0>} : vector<16x1xi32>
    %c16_i32_1 = arith.constant 16 : i32
    %4 = arith.muli %arg0, %c16_i32_1 : i32
    %5 = vector.broadcast %4 : i32 to vector<16x1xi32>
    %6 = arith.addi %3, %5 : vector<16x1xi32>
    %cst = arith.constant 0.000000e+00 : f32
    %7 = vector.broadcast %cst : f32 to vector<16x1xf32>
    %cst_2 = arith.constant -1.000000e+09 : f32
    %8 = vector.broadcast %cst_2 : f32 to vector<16x1xf32>
    %cst_3 = arith.constant 1.000000e+09 : f32
    %9 = vector.broadcast %cst_3 : f32 to vector<16x1xf32>
    %c0_i32 = arith.constant 0 : i32
    %c16_i32_4 = arith.constant 16 : i32
    %10 = arith.muli %c0_i32, %c16_i32_4 : i32
    %11 = tpu.assume_multiple %10, 16 : i32
    %12 = arith.index_cast %1 : i32 to index
    %c0_5 = arith.constant 0 : index
    %13 = vector.load %arg1[%12, %c0_5] : memref<16x128xbf16, #tpu.memory_space<vmem>>, vector<16x128xbf16>
    %14 = arith.index_cast %11 : i32 to index
    %c0_6 = arith.constant 0 : index
    %15 = vector.load %arg1[%14, %c0_6] : memref<16x128xbf16, #tpu.memory_space<vmem>>, vector<16x128xbf16>
    %cst_7 = arith.constant dense<0.000000e+00> : vector<16x16xf32>
    %16 = tpu.matmul %13, %15, %cst_7 {dimension_numbers = #tpu.dot_dimension_numbers<[1], [1], [0], [0], [0, 0, 1, 0], [], []>} : vector<16x128xbf16>, vector<16x128xbf16>, vector<16x16xf32> -> vector<16x16xf32>
    %17 = arith.index_cast %c0_i32 : i32 to index
    %c0_8 = arith.constant 0 : index
    %c0_9 = arith.constant 0 : index
    %18 = vector.load %arg5[%17, %c0_8, %c0_9] : memref<1x16x16xf32, #tpu.memory_space<vmem>>, vector<1x16x16xf32>
    %19 = vector.shape_cast %18 : vector<1x16x16xf32> to vector<16x16xf32>
    %20 = vector.shape_cast %16 : vector<16x16xf32> to vector<1x16x16xf32>
    tpu.vector_store %arg5[%17, %c0_8, %c0_9], %20 {strides = array<i32>} : memref<1x16x16xf32, #tpu.memory_space<vmem>>, vector<1x16x16xf32>,
    %21 = arith.index_cast %c0_i32 : i32 to index
    %c0_10 = arith.constant 0 : index
    %c0_11 = arith.constant 0 : index
    %22 = vector.load %arg2[%21, %c0_10, %c0_11] : memref<1x1x16xi32, #tpu.memory_space<vmem>>, vector<1x1x16xi32>
    %23 = vector.shape_cast %22 : vector<1x1x16xi32> to vector<1x16xi32>
    %24 = vector.broadcast %2 : vector<16x1xi32> to vector<16x16xi32>
    %25 = vector.broadcast %23 : vector<1x16xi32> to vector<16x16xi32>
    %26 = arith.cmpi eq, %24, %25 : vector<16x16xi32>
    %27 = tpu.iota {dimensions = array<i32: 1>} : vector<16x16xi32>
    %c16_i32_12 = arith.constant 16 : i32
    %28 = arith.muli %c0_i32, %c16_i32_12 : i32
    %29 = vector.broadcast %28 : i32 to vector<16x16xi32>
    %30 = arith.addi %27, %29 : vector<16x16xi32>
    %cst_13 = arith.constant dense<true> : vector<16x16xi1>
    %31 = arith.xori %26, %cst_13 : vector<16x16xi1>
    %32 = vector.broadcast %6 : vector<16x1xi32> to vector<16x16xi32>
    %33 = arith.cmpi ne, %30, %32 : vector<16x16xi32>
    %34 = arith.andi %26, %33 : vector<16x16xi1>
    %cst_14 = arith.constant 0.999989986 : f32
    %35 = vector.broadcast %cst_14 : f32 to vector<16x16xf32>
    %36 = arith.cmpf olt, %16, %35 : vector<16x16xf32>
    %37 = arith.andi %34, %36 : vector<16x16xi1>
    %c8_i32 = arith.constant 8 : i32
    %38 = vector.broadcast %c8_i32 : i32 to vector<16x16xi32>
    %39 = arith.cmpi slt, %30, %38 : vector<16x16xi32>
    %40 = arith.andi %31, %39 : vector<16x16xi1>
    %41 = arith.andi %37, %39 : vector<16x16xi1>
    %cst_15 = arith.constant dense<0.000000e+00> : vector<16xf32>
    %42 = vector.multi_reduction <add>, %16, %cst_15 [1] : vector<16x16xf32> to vector<16xf32>
    %43 = vector.shape_cast %42 : vector<16xf32> to vector<16x1xf32>
    %44 = arith.addf %7, %43 : vector<16x1xf32>
    %cst_16 = arith.constant -1.000000e+09 : f32
    %45 = vector.broadcast %cst_16 : f32 to vector<16x16xf32>
    %46 = arith.select %40, %16, %45 : vector<16x16xi1>, vector<16x16xf32>
    %cst_17 = arith.constant dense<0xFF800000> : vector<16xf32>
    %47 = vector.multi_reduction <maximumf>, %46, %cst_17 [1] : vector<16x16xf32> to vector<16xf32>
    %48 = vector.shape_cast %47 : vector<16xf32> to vector<16x1xf32>
    %49 = arith.maximumf %8, %48 : vector<16x1xf32>
    %cst_18 = arith.constant 1.000000e+09 : f32
    %50 = vector.broadcast %cst_18 : f32 to vector<16x16xf32>
    %51 = arith.select %41, %16, %50 : vector<16x16xi1>, vector<16x16xf32>
    %cst_19 = arith.constant dense<0x7F800000> : vector<16xf32>
    %52 = vector.multi_reduction <minimumf>, %51, %cst_19 [1] : vector<16x16xf32> to vector<16xf32>
    %53 = vector.shape_cast %52 : vector<16xf32> to vector<16x1xf32>
    %54 = arith.minimumf %9, %53 : vector<16x1xf32>
    %c1_i32 = arith.constant 1 : i32
    %cst_20 = arith.constant 1.250000e-01 : f32
    %55 = vector.broadcast %cst_20 : f32 to vector<16x1xf32>
    %56 = arith.mulf %44, %55 : vector<16x1xf32>
    %cst_21 = arith.constant 5.000000e-01 : f32
    %57 = vector.broadcast %cst_21 : f32 to vector<16x1xf32>
    %58 = arith.mulf %57, %56 : vector<16x1xf32>
    %59 = arith.addf %54, %49 : vector<16x1xf32>
    %cst_22 = arith.constant 2.500000e-01 : f32
    %60 = vector.broadcast %cst_22 : f32 to vector<16x1xf32>
    %61 = arith.mulf %60, %59 : vector<16x1xf32>
    %62 = arith.addf %58, %61 : vector<16x1xf32>
    %cst_23 = arith.constant 1.000000e-01 : f32
    %63 = vector.broadcast %cst_23 : f32 to vector<16x1xf32>
    %64 = arith.addf %49, %63 : vector<16x1xf32>
    %cst_24 = arith.constant 0.999989986 : f32
    %65 = vector.broadcast %cst_24 : f32 to vector<16x1xf32>
    %66 = arith.minimumf %64, %65 : vector<16x1xf32>
    %cst_25 = arith.constant 1.000000e-01 : f32
    %67 = vector.broadcast %cst_25 : f32 to vector<16x1xf32>
    %68 = arith.subf %54, %67 : vector<16x1xf32>
    %c0_i32_26 = arith.constant 0 : i32
    %69 = arith.index_cast %c0_i32_26 : i32 to index
    %c0_27 = arith.constant 0 : index
    %c0_28 = arith.constant 0 : index
    %70 = vector.load %arg5[%69, %c0_27, %c0_28] : memref<1x16x16xf32, #tpu.memory_space<vmem>>, vector<1x16x16xf32>
    %71 = vector.shape_cast %70 : vector<1x16x16xf32> to vector<16x16xf32>
    %72 = arith.index_cast %c0_i32_26 : i32 to index
    %c0_29 = arith.constant 0 : index
    %c0_30 = arith.constant 0 : index
    %73 = vector.load %arg2[%72, %c0_29, %c0_30] : memref<1x1x16xi32, #tpu.memory_space<vmem>>, vector<1x1x16xi32>
    %74 = vector.shape_cast %73 : vector<1x1x16xi32> to vector<1x16xi32>
    %75 = vector.broadcast %2 : vector<16x1xi32> to vector<16x16xi32>
    %76 = vector.broadcast %74 : vector<1x16xi32> to vector<16x16xi32>
    %77 = arith.cmpi eq, %75, %76 : vector<16x16xi32>
    %78 = tpu.iota {dimensions = array<i32: 1>} : vector<16x16xi32>
    %c16_i32_31 = arith.constant 16 : i32
    %79 = arith.muli %c0_i32_26, %c16_i32_31 : i32
    %80 = vector.broadcast %79 : i32 to vector<16x16xi32>
    %81 = arith.addi %78, %80 : vector<16x16xi32>
    %cst_32 = arith.constant dense<true> : vector<16x16xi1>
    %82 = arith.xori %77, %cst_32 : vector<16x16xi1>
    %83 = vector.broadcast %6 : vector<16x1xi32> to vector<16x16xi32>
    %84 = arith.cmpi ne, %81, %83 : vector<16x16xi32>
    %85 = arith.andi %77, %84 : vector<16x16xi1>
    %c8_i32_33 = arith.constant 8 : i32
    %86 = vector.broadcast %c8_i32_33 : i32 to vector<16x16xi32>
    %87 = arith.cmpi slt, %81, %86 : vector<16x16xi32>
    %88 = arith.andi %82, %87 : vector<16x16xi1>
    %89 = arith.andi %85, %87 : vector<16x16xi1>
    %cst_34 = arith.constant 5.000000e-01 : f32
    %90 = vector.broadcast %cst_34 : f32 to vector<16x16xf32>
    %91 = arith.mulf %90, %71 : vector<16x16xf32>
    %92 = math.exp %91 : vector<16x16xf32>
    %cst_35 = arith.constant 0.818730771 : f32
    %93 = vector.broadcast %cst_35 : f32 to vector<16x16xf32>
    %94 = arith.mulf %93, %92 : vector<16x16xf32>
    %95 = tpu.reciprocal %92 {approx = true} : vector<16x16xf32> -> vector<16x16xf32>
    %cst_36 = arith.constant 2.71828175 : f32
    %96 = vector.broadcast %cst_36 : f32 to vector<16x16xf32>
    %97 = arith.mulf %96, %95 : vector<16x16xf32>
    %98 = vector.broadcast %66 : vector<16x1xf32> to vector<16x16xf32>
    %99 = arith.cmpf olt, %71, %98 : vector<16x16xf32>
    %100 = arith.andi %89, %99 : vector<16x16xi1>
    %cst_37 = arith.constant 0.000000e+00 : f32
    %101 = vector.broadcast %cst_37 : f32 to vector<16x16xf32>
    %102 = arith.select %100, %97, %101 : vector<16x16xi1>, vector<16x16xf32>
    %cst_38 = arith.constant dense<0.000000e+00> : vector<16xf32>
    %103 = vector.multi_reduction <add>, %102, %cst_38 [1] : vector<16x16xf32> to vector<16xf32>
    %104 = vector.shape_cast %103 : vector<16xf32> to vector<16x1xf32>
    %105 = arith.addf %7, %104 : vector<16x1xf32>
    %106 = vector.broadcast %68 : vector<16x1xf32> to vector<16x16xf32>
    %107 = arith.cmpf ogt, %71, %106 : vector<16x16xf32>
    %108 = arith.andi %88, %107 : vector<16x16xi1>
    %cst_39 = arith.constant 0.000000e+00 : f32
    %109 = vector.broadcast %cst_39 : f32 to vector<16x16xf32>
    %110 = arith.select %108, %94, %109 : vector<16x16xi1>, vector<16x16xf32>
    %cst_40 = arith.constant dense<0.000000e+00> : vector<16xf32>
    %111 = vector.multi_reduction <add>, %110, %cst_40 [1] : vector<16x16xf32> to vector<16xf32>
    %112 = vector.shape_cast %111 : vector<16xf32> to vector<16x1xf32>
    %113 = arith.addf %7, %112 : vector<16x1xf32>
    %114 = vector.broadcast %62 : vector<16x1xf32> to vector<16x16xf32>
    %115 = arith.subf %71, %114 : vector<16x16xf32>
    %cst_41 = arith.constant 0.000000e+00 : f32
    %116 = vector.broadcast %cst_41 : f32 to vector<16x16xf32>
    %117 = arith.select %88, %115, %116 : vector<16x16xi1>, vector<16x16xf32>
    %118 = arith.mulf %117, %117 : vector<16x16xf32>
    %cst_42 = arith.constant dense<0.000000e+00> : vector<16xf32>
    %119 = vector.multi_reduction <add>, %118, %cst_42 [1] : vector<16x16xf32> to vector<16xf32>
    %120 = vector.shape_cast %119 : vector<16xf32> to vector<16x1xf32>
    %121 = arith.addf %7, %120 : vector<16x1xf32>
    %c1_i32_43 = arith.constant 1 : i32
    %cst_44 = arith.constant 1.000000e+00 : f32
    %122 = vector.broadcast %cst_44 : f32 to vector<16x1xf32>
    %123 = arith.addf %122, %105 : vector<16x1xf32>
    %124 = math.log %123 : vector<16x1xf32>
    %cst_45 = arith.constant 1.000000e+00 : f32
    %125 = vector.broadcast %cst_45 : f32 to vector<16x1xf32>
    %126 = arith.addf %125, %113 : vector<16x1xf32>
    %127 = math.log %126 : vector<16x1xf32>
    %128 = arith.addf %124, %127 : vector<16x1xf32>
    %cst_46 = arith.constant 1.000000e+00 : f32
    %129 = vector.broadcast %cst_46 : f32 to vector<16x1xf32>
    %130 = arith.mulf %129, %121 : vector<16x1xf32>
    %131 = arith.addf %128, %130 : vector<16x1xf32>
    %cst_47 = arith.constant 5.000000e+08 : f32
    %132 = vector.broadcast %cst_47 : f32 to vector<16x1xf32>
    %133 = arith.cmpf olt, %54, %132 : vector<16x1xf32>
    %cst_48 = arith.constant -5.000000e+08 : f32
    %134 = vector.broadcast %cst_48 : f32 to vector<16x1xf32>
    %135 = arith.cmpf ogt, %49, %134 : vector<16x1xf32>
    %136 = arith.andi %133, %135 : vector<16x1xi1>
    %137 = arith.subf %54, %49 : vector<16x1xf32>
    %cst_49 = arith.constant 1.000000e-01 : f32
    %138 = vector.broadcast %cst_49 : f32 to vector<16x1xf32>
    %139 = arith.cmpf olt, %137, %138 : vector<16x1xf32>
    %140 = arith.andi %136, %139 : vector<16x1xi1>
    %cst_50 = arith.constant 0.000000e+00 : f32
    %141 = vector.broadcast %cst_50 : f32 to vector<16x1xf32>
    %142 = arith.select %140, %131, %141 : vector<16x1xi1>, vector<16x1xf32>
    %c0_51 = arith.constant 0 : index
    %c0_52 = arith.constant 0 : index
    %143 = vector.load %arg4[%c0_51, %c0_52] : memref<16x1xf32, #tpu.memory_space<vmem>>, vector<16x1xf32>
    tpu.vector_store %arg4[%c0_51, %c0_52], %142 {strides = array<i32>} : memref<16x1xf32, #tpu.memory_space<vmem>>, vector<16x1xf32>,
    return
  }
  func.func @transform_0(%arg0: i32) -> (i32, i32) {
    %c0_i32 = arith.constant 0 : i32
    %c0_i32_0 = arith.constant 0 : i32
    %c0_i32_1 = arith.constant 0 : i32
    return %c0_i32, %c0_i32_0 : i32, i32
  }
  func.func @transform_1(%arg0: i32) -> (i32, i32, i32) {
    %c0_i32 = arith.constant 0 : i32
    %c0_i32_0 = arith.constant 0 : i32
    %c0_i32_1 = arith.constant 0 : i32
    %c0_i32_2 = arith.constant 0 : i32
    return %c0_i32, %c0_i32_0, %c0_i32_1 : i32, i32, i32
  }
  func.func @transform_2(%arg0: i32) -> (i32, i32) {
    %c0_i32 = arith.constant 0 : i32
    %c0_i32_0 = arith.constant 0 : i32
    return %arg0, %c0_i32 : i32, i32
  }
  func.func @transform_3(%arg0: i32) -> (i32, i32) {
    %c0_i32 = arith.constant 0 : i32
    %c0_i32_0 = arith.constant 0 : i32
    return %arg0, %c0_i32 : i32, i32
  }
}

</mosaic_0001>

<llo_original>
// kernel: cbml_loss.1
$region0: #{cbml_loss.1}
  #allocation0 [shape = 'u32[]', space=smem, size = 0x4, offset = 0x4, fixed_abs, tag = 'smem constant byte address 0x4 - core index']
  #allocation1 [shape = 'u32[72,128]{1,0:T(1,128)}', space=vmem, size = 0x9000, scoped, tag = 'internal scratch']
  #allocation2 [shape = 'f32[1,16,16]{2,1,0:T(8,128)}', space=vmem, size = 0x2000, scoped, tag = 'scratch operand']
  %s0 = inlined_call_operand.vmem [shape: bf16[16,128], index: 0, kind: input, shape index: {}]
  %s1 = inlined_call_operand.vmem [shape: s32[1,1,16], index: 1, kind: input, shape index: {}]
  %s2 = inlined_call_operand.vmem [shape: s32[16,1], index: 2, kind: input, shape index: {}]
  %s3 = inlined_call_operand.vmem [shape: f32[16,1], index: 3, kind: output, shape index: {}]
  %s4 = sld [smem:[#allocation0]]
  $region22: #{cbml_loss.1} parent=0
    _
  %s6 = ssub.s32 1, %s4
  %s7 = scalar_select 0, %s6, %s4
  // Predicated region
  $region2: #{cbml_loss.1} parent=0 // pred_check
    _
  $region3: #{cbml_loss.1} parent=0 // pred_check_branch
    %9 = sbr.rel (0) target = $region5
  $region4: #{cbml_loss.1} parent=0 // pred_region
    _
  $region5: #{cbml_loss.1} parent=0 // pred_fallthru
    _
  // Predicated region
  $region6: #{cbml_loss.1} parent=0 // pred_check
    _
  $region7: #{cbml_loss.1} parent=0 // pred_check_branch
    %11 = sbr.rel (0) target = $region9
  $region8: #{cbml_loss.1} parent=0 // pred_region
    _
  $region9: #{cbml_loss.1} parent=0 // pred_fallthru
    _
  // Predicated region
  $region10: #{cbml_loss.1} parent=0 // pred_check
    _
  $region11: #{cbml_loss.1} parent=0 // pred_check_branch
    %13 = sbr.rel (0) target = $region13
  $region12: #{cbml_loss.1} parent=0 // pred_region
    _
  $region13: #{cbml_loss.1} parent=0 // pred_fallthru
    _
  %s15 = smul.u32 0, 16
  %v16 = vld [vmem:[%s2] sm:$0xff]
  %v17 = vld [vmem:[%s2 + $0x8] sm:$0xff]
  %v18 = vlaneseq
  %v19 = vshrl.u32 %v18, 7
  %v20 = vadd.s32 %v19, 8
  %v21 = vstv %s15
  %v22 = vadd.s32 %v19, %v21
  %v23 = vadd.s32 %v20, %v21
  %s24 = sshra.s32 %s15, 3
  %s25 = sand.u32 %s15, 7
  %s26 = smul.addr %s24, 4
  %s27 = scalar_lea.vmem %s0, %s26
  %v28 = vld [vmem:[%s27] sm:$0xf]
  %v29 = vld [vmem:[%s27 + $0x4] sm:$0xf]
  %v30 = vld [vmem:[%s0] sm:$0xf]
  %v31 = vld [vmem:[%s0 + $0x4] sm:$0xf]
  %v34 = vunpack.c.l.b16 %v28
  %v35 = vunpack.c.l.b16 %v29
  %v36 = vpack.c.b16 %v35, %v34
  %v40 = vunpack.c.l.b16 %v30
  %v41 = vunpack.c.l.b16 %v31
  %v42 = vpack.c.b16 %v41, %v40
  %44 = vmatpush.bf16.xpose.msra.mxu0 0
  %45 = vmatpush.bf16.xpose.msra.mxu0 0
  %46 = vmatpush.bf16.xpose.msra.mxu0 0
  %47 = vmatpush.bf16.xpose.msra.mxu0 0
  %48 = vmatpush.bf16.xpose.msra.mxu0 0
  %49 = vmatpush.bf16.xpose.msra.mxu0 0
  %50 = vmatpush.bf16.xpose.msra.mxu0 0
  %51 = vmatpush.bf16.xpose.msra.mxu0 %v42
  %52 = vmatmul.bf16.gmra.mxu0 %v36
  %v53 = vpop.f32.mrf.mxu0
  %v54 = vadd.f32 0.0, %v53
  %v55 = vpop.f32.mrf.mxu0
  %v56 = vadd.f32 0.0, %v55
  %57 = vdwg.mxu0
  %vm58 = vcmask 130048
  %59 = vst.msk [vmem:[#allocation2] sm:$0xff] %vm58, %v54
  %60 = vst.msk [vmem:[#allocation2 + $0x8] sm:$0xff] %vm58, %v56
  %v61 = vld [vmem:[%s1] sm:$0x1]
  %62 = vset.pattern.permute.xlu0 0
  %63 = vperm.xlu0 %62, %v16
  %v64 = vpop.permute.xlu0 %63
  %65 = vset.pattern.permute.xlu0 0
  %66 = vperm.xlu0 %65, %v17
  %v67 = vpop.permute.xlu0 %66
  %v68 = vperm.slane %v61, 0
  %vm69 = vcmp.eq.s32.totalorder %v64, %v68
  %vm70 = vcmp.eq.s32.totalorder %v67, %v68
  %v71 = vlaneseq
  %v72 = vand.u32 %v71, 127
  %vm73 = vmxor %vm69, 1
  %vm74 = vmxor %vm70, 1
  %vm75 = vcmp.ne.s32.totalorder %v72, %v22
  %vm76 = vcmp.ne.s32.totalorder %v72, %v23
  %vm77 = vmand %vm69, %vm75
  %vm78 = vmand %vm70, %vm76
  %vm79 = vcmp.lt.f32.partialorder %v54, 0.99999
  %vm80 = vcmp.lt.f32.partialorder %v56, 0.99999
  %vm81 = vmand %vm77, %vm79
  %vm82 = vmand %vm78, %vm80
  %vm83 = vcmp.lt.s32.totalorder %v72, 8
  %vm84 = vmand %vm73, %vm83
  %vm85 = vmand %vm74, %vm83
  %vm86 = vmand %vm81, %vm83
  %vm87 = vmand %vm82, %vm83
  %v88 = vsel %vm58, %v54, 0.0
  %89 = vadd.xlane.f32.xlu0 %v88
  %v90 = vpop.xlane.xlu0 %89
  %v91 = vsel %vm58, %v56, 0.0
  %92 = vadd.xlane.f32.xlu0 %v91
  %v93 = vpop.xlane.xlu0 %92
  %v94 = vadd.f32 %v90, 0.0
  %v95 = vadd.f32 %v93, 0.0
  %v96 = vsel %vm84, %v54, -1e+09
  %v97 = vsel %vm85, %v56, -1e+09
  %v98 = vsel %vm58, %v96, -inf
  %99 = vmax.xlane.f32.xlu0 %v98
  %v100 = vpop.xlane.xlu0 %99
  %v101 = vsel %vm58, %v97, -inf
  %102 = vmax.xlane.f32.xlu0 %v101
  %v103 = vpop.xlane.xlu0 %102
  %v104 = vmax.f32 %v100, -1e+09
  %v105 = vmax.f32 %v103, -1e+09
  %v106 = vsel %vm86, %v54, 1e+09
  %v107 = vsel %vm87, %v56, 1e+09
  %v108 = vsel %vm58, %v106, inf
  %109 = vmin.xlane.f32.xlu0 %v108
  %v110 = vpop.xlane.xlu0 %109
  %v111 = vsel %vm58, %v107, inf
  %112 = vmin.xlane.f32.xlu0 %v111
  %v113 = vpop.xlane.xlu0 %112
  %v114 = vmin.f32 %v110, 1e+09
  %v115 = vmin.f32 %v113, 1e+09
  %v116 = vmul.f32 %v94, 0.125
  %v117 = vmul.f32 %v95, 0.125
  %v118 = vmul.f32 %v116, 0.5
  %v119 = vmul.f32 %v117, 0.5
  %v120 = vadd.f32 %v114, %v104
  %v121 = vadd.f32 %v115, %v105
  %v122 = vmul.f32 %v120, 0.25
  %v123 = vmul.f32 %v121, 0.25
  %v124 = vadd.f32 %v118, %v122
  %v125 = vadd.f32 %v119, %v123
  %v126 = vadd.f32 %v104, 0.1
  %v127 = vadd.f32 %v105, 0.1
  %v128 = vmin.f32 %v126, 0.99999
  %v129 = vmin.f32 %v127, 0.99999
  %v130 = vsub.f32 %v114, 0.1
  %v131 = vsub.f32 %v115, 0.1
  %v132 = vld [vmem:[#allocation2] sm:$0xff]
  %v133 = vld [vmem:[#allocation2 + $0x8] sm:$0xff]
  %vm134 = vmand %vm77, %vm83
  %vm135 = vmand %vm78, %vm83
  %v136 = vmul.f32 %v132, 0.5
  %v137 = vmul.f32 %v133, 0.5
  %v138 = vmul.f32 %v136, 1.442695
  %v139 = vpow.pop %v138
  %v140 = vmul.f32 %v137, 1.442695
  %v141 = vpow.pop %v140
  %v142 = vmul.f32 %v139, 0.8187308
  %v143 = vmul.f32 %v141, 0.8187308
  %v144 = vrcp.pop %v139
  %v145 = vrcp.pop %v141
  %v146 = vmul.f32 %v144, 2.7182817
  %v147 = vmul.f32 %v145, 2.7182817
  %vm148 = vcmp.lt.f32.partialorder %v132, %v128
  %vm149 = vcmp.lt.f32.partialorder %v133, %v129
  %vm150 = vmand %vm134, %vm148
  %vm151 = vmand %vm135, %vm149
  %v152 = vsel %vm150, %v146, 0.0
  %v153 = vsel %vm151, %v147, 0.0
  %v154 = vsel %vm58, %v152, 0.0
  %155 = vadd.xlane.f32.xlu0 %v154
  %v156 = vpop.xlane.xlu0 %155
  %v157 = vsel %vm58, %v153, 0.0
  %158 = vadd.xlane.f32.xlu0 %v157
  %v159 = vpop.xlane.xlu0 %158
  %v160 = vadd.f32 %v156, 0.0
  %v161 = vadd.f32 %v159, 0.0
  %vm162 = vcmp.gt.f32.partialorder %v132, %v130
  %vm163 = vcmp.gt.f32.partialorder %v133, %v131
  %vm164 = vmand %vm84, %vm162
  %vm165 = vmand %vm85, %vm163
  %v166 = vsel %vm164, %v142, 0.0
  %v167 = vsel %vm165, %v143, 0.0
  %v168 = vsel %vm58, %v166, 0.0
  %169 = vadd.xlane.f32.xlu0 %v168
  %v170 = vpop.xlane.xlu0 %169
  %v171 = vsel %vm58, %v167, 0.0
  %172 = vadd.xlane.f32.xlu0 %v171
  %v173 = vpop.xlane.xlu0 %172
  %v174 = vadd.f32 %v170, 0.0
  %v175 = vadd.f32 %v173, 0.0
  %v176 = vsub.f32 %v132, %v124
  %v177 = vsub.f32 %v133, %v125
  %v178 = vsel %vm84, %v176, 0.0
  %v179 = vsel %vm85, %v177, 0.0
  %v180 = vmul.f32 %v178, %v178
  %v181 = vmul.f32 %v179, %v179
  %v182 = vsel %vm58, %v180, 0.0
  %183 = vadd.xlane.f32.xlu0 %v182
  %v184 = vpop.xlane.xlu0 %183
  %v185 = vsel %vm58, %v181, 0.0
  %186 = vadd.xlane.f32.xlu0 %v185
  %v187 = vpop.xlane.xlu0 %186
  %v188 = vadd.f32 %v184, 0.0
  %v189 = vadd.f32 %v187, 0.0
  %v190 = vadd.f32 %v160, 1.0
  %v191 = vadd.f32 %v161, 1.0
  %v192 = vlog2.pop %v190
  %v193 = vmul.f32 %v192, 0.6931472
  %v194 = vlog2.pop %v191
  %v195 = vmul.f32 %v194, 0.6931472
  %v196 = vadd.f32 %v174, 1.0
  %v197 = vadd.f32 %v175, 1.0
  %v198 = vlog2.pop %v196
  %v199 = vmul.f32 %v198, 0.6931472
  %v200 = vlog2.pop %v197
  %v201 = vmul.f32 %v200, 0.6931472
  %v202 = vadd.f32 %v193, %v199
  %v203 = vadd.f32 %v195, %v201
  %v204 = vadd.f32 %v202, %v188
  %v205 = vadd.f32 %v203, %v189
  %vm206 = vcmp.lt.f32.partialorder %v114, 5e+08
  %vm207 = vcmp.lt.f32.partialorder %v115, 5e+08
  %vm208 = vcmp.gt.f32.partialorder %v104, -5e+08
  %vm209 = vcmp.gt.f32.partialorder %v105, -5e+08
  %vm210 = vmand %vm206, %vm208
  %vm211 = vmand %vm207, %vm209
  %v212 = vsub.f32 %v114, %v104
  %v213 = vsub.f32 %v115, %v105
  %vm214 = vcmp.lt.f32.partialorder %v212, 0.1
  %vm215 = vcmp.lt.f32.partialorder %v213, 0.1
  %vm216 = vmand %vm210, %vm214
  %vm217 = vmand %vm211, %vm215
  %v218 = vsel %vm216, %v204, 0.0
  %v219 = vsel %vm217, %v205, 0.0
  %vm220 = vcmask 7168
  %221 = vst.msk [vmem:[%s3] sm:$0xff] %vm220, %v218
  %222 = vst.msk [vmem:[%s3 + $0x8] sm:$0xff] %vm220, %v219
  // Predicated region
  $region14: #{cbml_loss.1} parent=0 // pred_check
    _
  $region15: #{cbml_loss.1} parent=0 // pred_check_branch
    %224 = sbr.rel (0) target = $region17
  $region16: #{cbml_loss.1} parent=0 // pred_region
    _
  $region17: #{cbml_loss.1} parent=0 // pred_fallthru
    _
  // Predicated region
  $region18: #{cbml_loss.1} parent=0 // pred_check
    _
  $region19: #{cbml_loss.1} parent=0 // pred_check_branch
    %226 = sbr.rel (0) target = $region21
  $region20: #{cbml_loss.1} parent=0 // pred_region
    _
  $region21: #{cbml_loss.1} parent=0 // pred_fallthru
    _

// kernel: cbml_loss.1
$region0: #{cbml_loss.1}
  #allocation0 [shape = 'u32[]', space=smem, size = 0x4, offset = 0x4, fixed_abs, tag = 'smem constant byte address 0x4 - core index']
  #allocation1 [shape = 'u32[72,128]{1,0:T(1,128)}', space=vmem, size = 0x9000, scoped, tag = 'internal scratch']
  #allocation2 [shape = 'f32[1,16,16]{2,1,0:T(8,128)}', space=vmem, size = 0x2000, scoped, tag = 'scratch operand']
  %s0 = inlined_call_operand.vmem [shape: bf16[16,128], index: 0, kind: input, shape index: {}]
  %s1 = inlined_call_operand.vmem [shape: s32[1,1,16], index: 1, kind: input, shape index: {}]
  %s2 = inlined_call_operand.vmem [shape: s32[16,1], index: 2, kind: input, shape index: {}]
  %s3 = inlined_call_operand.vmem [shape: f32[16,1], index: 3, kind: output, shape index: {}]
  %s4 = sld [smem:[#allocation0]]
  $region22: #{cbml_loss.1} parent=0
    _
  %s6 = ssub.s32 1, %s4
  %s7 = scalar_select 0, %s6, %s4
  // Predicated region
  $region2: #{cbml_loss.1} parent=0 // pred_check
    _
  $region3: #{cbml_loss.1} parent=0 // pred_check_branch
    %9 = sbr.rel (0) target = $region5
  $region4: #{cbml_loss.1} parent=0 // pred_region
    _
  $region5: #{cbml_loss.1} parent=0 // pred_fallthru
    _
  // Predicated region
  $region6: #{cbml_loss.1} parent=0 // pred_check
    _
  $region7: #{cbml_loss.1} parent=0 // pred_check_branch
    %11 = sbr.rel (0) target = $region9
  $region8: #{cbml_loss.1} parent=0 // pred_region
    _
  $region9: #{cbml_loss.1} parent=0 // pred_fallthru
    _
  // Predicated region
  $region10: #{cbml_loss.1} parent=0 // pred_check
    _
  $region11: #{cbml_loss.1} parent=0 // pred_check_branch
    %13 = sbr.rel (0) target = $region13
  $region12: #{cbml_loss.1} parent=0 // pred_region
    _
  $region13: #{cbml_loss.1} parent=0 // pred_fallthru
    _
  %s15 = smul.u32 0, 16
  %v16 = vld [vmem:[%s2] sm:$0xff]
  %v17 = vld [vmem:[%s2 + $0x8] sm:$0xff]
  %v18 = vlaneseq
  %v19 = vshrl.u32 %v18, 7
  %v20 = vadd.s32 %v19, 8
  %v21 = vstv %s15
  %v22 = vadd.s32 %v19, %v21
  %v23 = vadd.s32 %v20, %v21
  %s24 = sshra.s32 %s15, 3
  %s25 = sand.u32 %s15, 7
  %s26 = smul.addr %s24, 4
  %s27 = scalar_lea.vmem %s0, %s26
  %v28 = vld [vmem:[%s27] sm:$0xf]
  %v29 = vld [vmem:[%s27 + $0x4] sm:$0xf]
  %v30 = vld [vmem:[%s0] sm:$0xf]
  %v31 = vld [vmem:[%s0 + $0x4] sm:$0xf]
  %v34 = vunpack.c.l.b16 %v28
  %v35 = vunpack.c.l.b16 %v29
  %v36 = vpack.c.b16 %v35, %v34
  %v40 = vunpack.c.l.b16 %v30
  %v41 = vunpack.c.l.b16 %v31
  %v42 = vpack.c.b16 %v41, %v40
  %44 = vmatpush.bf16.xpose.msra.mxu0 0
  %45 = vmatpush.bf16.xpose.msra.mxu0 0
  %46 = vmatpush.bf16.xpose.msra.mxu0 0
  %47 = vmatpush.bf16.xpose.msra.mxu0 0
  %48 = vmatpush.bf16.xpose.msra.mxu0 0
  %49 = vmatpush.bf16.xpose.msra.mxu0 0
  %50 = vmatpush.bf16.xpose.msra.mxu0 0
  %51 = vmatpush.bf16.xpose.msra.mxu0 %v42
  %52 = vmatmul.bf16.gmra.mxu0 %v36
  %v53 = vpop.f32.mrf.mxu0
  %v54 = vadd.f32 0.0, %v53
  %v55 = vpop.f32.mrf.mxu0
  %v56 = vadd.f32 0.0, %v55
  %57 = vdwg.mxu0
  %vm58 = vcmask 130048
  %59 = vst.msk [vmem:[#allocation2] sm:$0xff] %vm58, %v54
  %60 = vst.msk [vmem:[#allocation2 + $0x8] sm:$0xff] %vm58, %v56
  %v61 = vld [vmem:[%s1] sm:$0x1]
  %62 = vset.pattern.permute.xlu0 0
  %63 = vperm.xlu0 %62, %v16
  %v64 = vpop.permute.xlu0 %63
  %65 = vset.pattern.permute.xlu0 0
  %66 = vperm.xlu0 %65, %v17
  %v67 = vpop.permute.xlu0 %66
  %v68 = vperm.slane %v61, 0
  %vm69 = vcmp.eq.s32.totalorder %v64, %v68
  %vm70 = vcmp.eq.s32.totalorder %v67, %v68
  %v71 = vlaneseq
  %v72 = vand.u32 %v71, 127
  %vm73 = vmxor %vm69, 1
  %vm74 = vmxor %vm70, 1
  %vm75 = vcmp.ne.s32.totalorder %v72, %v22
  %vm76 = vcmp.ne.s32.totalorder %v72, %v23
  %vm77 = vmand %vm69, %vm75
  %vm78 = vmand %vm70, %vm76
  %vm79 = vcmp.lt.f32.partialorder %v54, 0.99999
  %vm80 = vcmp.lt.f32.partialorder %v56, 0.99999
  %vm81 = vmand %vm77, %vm79
  %vm82 = vmand %vm78, %vm80
  %vm83 = vcmp.lt.s32.totalorder %v72, 8
  %vm84 = vmand %vm73, %vm83
  %vm85 = vmand %vm74, %vm83
  %vm86 = vmand %vm81, %vm83
  %vm87 = vmand %vm82, %vm83
  %v88 = vsel %vm58, %v54, 0.0
  %89 = vadd.xlane.f32.xlu0 %v88
  %v90 = vpop.xlane.xlu0 %89
  %v91 = vsel %vm58, %v56, 0.0
  %92 = vadd.xlane.f32.xlu0 %v91
  %v93 = vpop.xlane.xlu0 %92
  %v94 = vadd.f32 %v90, 0.0
  %v95 = vadd.f32 %v93, 0.0
  %v96 = vsel %vm84, %v54, -1e+09
  %v97 = vsel %vm85, %v56, -1e+09
  %v98 = vsel %vm58, %v96, -inf
  %99 = vmax.xlane.f32.xlu0 %v98
  %v100 = vpop.xlane.xlu0 %99
  %v101 = vsel %vm58, %v97, -inf
  %102 = vmax.xlane.f32.xlu0 %v101
  %v103 = vpop.xlane.xlu0 %102
  %v104 = vmax.f32 %v100, -1e+09
  %v105 = vmax.f32 %v103, -1e+09
  %v106 = vsel %vm86, %v54, 1e+09
  %v107 = vsel %vm87, %v56, 1e+09
  %v108 = vsel %vm58, %v106, inf
  %109 = vmin.xlane.f32.xlu0 %v108
  %v110 = vpop.xlane.xlu0 %109
  %v111 = vsel %vm58, %v107, inf
  %112 = vmin.xlane.f32.xlu0 %v111
  %v113 = vpop.xlane.xlu0 %112
  %v114 = vmin.f32 %v110, 1e+09
  %v115 = vmin.f32 %v113, 1e+09
  %v116 = vmul.f32 %v94, 0.125
  %v117 = vmul.f32 %v95, 0.125
  %v118 = vmul.f32 %v116, 0.5
  %v119 = vmul.f32 %v117, 0.5
  %v120 = vadd.f32 %v114, %v104
  %v121 = vadd.f32 %v115, %v105
  %v122 = vmul.f32 %v120, 0.25
  %v123 = vmul.f32 %v121, 0.25
  %v124 = vadd.f32 %v118, %v122
  %v125 = vadd.f32 %v119, %v123
  %v126 = vadd.f32 %v104, 0.1
  %v127 = vadd.f32 %v105, 0.1
  %v128 = vmin.f32 %v126, 0.99999
  %v129 = vmin.f32 %v127, 0.99999
  %v130 = vsub.f32 %v114, 0.1
  %v131 = vsub.f32 %v115, 0.1
  %v132 = vld [vmem:[#allocation2] sm:$0xff]
  %v133 = vld [vmem:[#allocation2 + $0x8] sm:$0xff]
  %vm134 = vmand %vm77, %vm83
  %vm135 = vmand %vm78, %vm83
  %v136 = vmul.f32 %v132, 0.5
  %v137 = vmul.f32 %v133, 0.5
  %v138 = vmul.f32 %v136, 1.442695
  %v139 = vpow.pop %v138
  %v140 = vmul.f32 %v137, 1.442695
  %v141 = vpow.pop %v140
  %v142 = vmul.f32 %v139, 0.8187308
  %v143 = vmul.f32 %v141, 0.8187308
  %v144 = vrcp.pop %v139
  %v145 = vrcp.pop %v141
  %v146 = vmul.f32 %v144, 2.7182817
  %v147 = vmul.f32 %v145, 2.7182817
  %vm148 = vcmp.lt.f32.partialorder %v132, %v128
  %vm149 = vcmp.lt.f32.partialorder %v133, %v129
  %vm150 = vmand %vm134, %vm148
  %vm151 = vmand %vm135, %vm149
  %v152 = vsel %vm150, %v146, 0.0
  %v153 = vsel %vm151, %v147, 0.0
  %v154 = vsel %vm58, %v152, 0.0
  %155 = vadd.xlane.f32.xlu0 %v154
  %v156 = vpop.xlane.xlu0 %155
  %v157 = vsel %vm58, %v153, 0.0
  %158 = vadd.xlane.f32.xlu0 %v157
  %v159 = vpop.xlane.xlu0 %158
  %v160 = vadd.f32 %v156, 0.0
  %v161 = vadd.f32 %v159, 0.0
  %vm162 = vcmp.gt.f32.partialorder %v132, %v130
  %vm163 = vcmp.gt.f32.partialorder %v133, %v131
  %vm164 = vmand %vm84, %vm162
  %vm165 = vmand %vm85, %vm163
  %v166 = vsel %vm164, %v142, 0.0
  %v167 = vsel %vm165, %v143, 0.0
  %v168 = vsel %vm58, %v166, 0.0
  %169 = vadd.xlane.f32.xlu0 %v168
  %v170 = vpop.xlane.xlu0 %169
  %v171 = vsel %vm58, %v167, 0.0
  %172 = vadd.xlane.f32.xlu0 %v171
  %v173 = vpop.xlane.xlu0 %172
  %v174 = vadd.f32 %v170, 0.0
  %v175 = vadd.f32 %v173, 0.0
  %v176 = vsub.f32 %v132, %v124
  %v177 = vsub.f32 %v133, %v125
  %v178 = vsel %vm84, %v176, 0.0
  %v179 = vsel %vm85, %v177, 0.0
  %v180 = vmul.f32 %v178, %v178
  %v181 = vmul.f32 %v179, %v179
  %v182 = vsel %vm58, %v180, 0.0
  %183 = vadd.xlane.f32.xlu0 %v182
  %v184 = vpop.xlane.xlu0 %183
  %v185 = vsel %vm58, %v181, 0.0
  %186 = vadd.xlane.f32.xlu0 %v185
  %v187 = vpop.xlane.xlu0 %186
  %v188 = vadd.f32 %v184, 0.0
  %v189 = vadd.f32 %v187, 0.0
  %v190 = vadd.f32 %v160, 1.0
  %v191 = vadd.f32 %v161, 1.0
  %v192 = vlog2.pop %v190
  %v193 = vmul.f32 %v192, 0.6931472
  %v194 = vlog2.pop %v191
  %v195 = vmul.f32 %v194, 0.6931472
  %v196 = vadd.f32 %v174, 1.0
  %v197 = vadd.f32 %v175, 1.0
  %v198 = vlog2.pop %v196
  %v199 = vmul.f32 %v198, 0.6931472
  %v200 = vlog2.pop %v197
  %v201 = vmul.f32 %v200, 0.6931472
  %v202 = vadd.f32 %v193, %v199
  %v203 = vadd.f32 %v195, %v201
  %v204 = vadd.f32 %v202, %v188
  %v205 = vadd.f32 %v203, %v189
  %vm206 = vcmp.lt.f32.partialorder %v114, 5e+08
  %vm207 = vcmp.lt.f32.partialorder %v115, 5e+08
  %vm208 = vcmp.gt.f32.partialorder %v104, -5e+08
  %vm209 = vcmp.gt.f32.partialorder %v105, -5e+08
  %vm210 = vmand %vm206, %vm208
  %vm211 = vmand %vm207, %vm209
  %v212 = vsub.f32 %v114, %v104
  %v213 = vsub.f32 %v115, %v105
  %vm214 = vcmp.lt.f32.partialorder %v212, 0.1
  %vm215 = vcmp.lt.f32.partialorder %v213, 0.1
  %vm216 = vmand %vm210, %vm214
  %vm217 = vmand %vm211, %vm215
  %v218 = vsel %vm216, %v204, 0.0
  %v219 = vsel %vm217, %v205, 0.0
  %vm220 = vcmask 7168
  %221 = vst.msk [vmem:[%s3] sm:$0xff] %vm220, %v218
  %222 = vst.msk [vmem:[%s3 + $0x8] sm:$0xff] %vm220, %v219
  // Predicated region
  $region14: #{cbml_loss.1} parent=0 // pred_check
    _
  $region15: #{cbml_loss.1} parent=0 // pred_check_branch
    %224 = sbr.rel (0) target = $region17
  $region16: #{cbml_loss.1} parent=0 // pred_region
    _
  $region17: #{cbml_loss.1} parent=0 // pred_fallthru
    _
  // Predicated region
  $region18: #{cbml_loss.1} parent=0 // pred_check
    _
  $region19: #{cbml_loss.1} parent=0 // pred_check_branch
    %226 = sbr.rel (0) target = $region21
  $region20: #{cbml_loss.1} parent=0 // pred_region
    _
  $region21: #{cbml_loss.1} parent=0 // pred_fallthru
    _

</llo_original>
